<compile_context>
chip_gen: v5e
topology: v5e:2x2
jax: 0.10.0
libtpu: 0.0.40
codegen_flags: <defaults>
</compile_context>

<pallas_src>
import math

import jax
import jax.numpy as jnp
from jax.experimental import pallas as pl
from jax.experimental.pallas import tpu as pltpu

LANE = 128          # pad the class dim to a lane-dense multiple of 128
NEG_BIG = -1e9      # bias for padded class lanes -> exp() underflows to 0


# ------------------------------ fused kernel ---------------------------------

def _make_fused_mlp_kernel(num_layers, classification):
    """Kernel computing the whole MLP for one batch tile.

    Ref layout (positional): x (bf16), W_0..W_{L-1} ((Din_l, Dout_l), bf16),
    b_0..b_{L-1} ((1, Dout_l), f32), out (f32, class dim padded to 128).
    """

    def kernel(*refs):
        x_ref = refs[0]
        w_refs = refs[1:1 + num_layers]
        b_refs = refs[1 + num_layers:1 + 2 * num_layers]
        o_ref = refs[1 + 2 * num_layers]

        h = x_ref[...]                              # bf16 straight off the DMA
        for l in range(num_layers):
            # bf16 operands on the MXU, f32 accumulation.
            y = jnp.dot(h.astype(jnp.bfloat16), w_refs[l][...],
                        preferred_element_type=jnp.float32)
            y = y + b_refs[l][...]                  # f32 bias (padded lanes -1e9)
            h = jnp.tanh(y) if l < num_layers - 1 else y

        if classification:
            # Full (padded) class dim lives in one block: complete reduction.
            # Padded lanes carry logit ~ -1e9 -> exp underflows to 0, so the
            # denominator only sees real classes.
            m = jnp.max(h, axis=1, keepdims=True)
            lse = m + jnp.log(jnp.sum(jnp.exp(h - m), axis=1, keepdims=True))
            h = h - lse

        o_ref[...] = h.astype(o_ref.dtype)

    return kernel


# ------------------------------ params / wrapper ------------------------------

def init_perceptron_params(key, layers, sigma_w=1.0, sigma_b=1.0, scaling=False):
    """Mirrors Perceptron.reset_parameters with normal samplers.

    Weights are stored pre-transposed as (in_features, out_features) in bf16;
    biases as (1, out_features) in f32.  The forward-pass `scaling` divisions
    are folded into the weights here.  The last layer is padded along the
    class dim to a multiple of 128 (zero weight columns, -1e9 bias) so the
    kernel stores a lane-dense output.
    first_layer_normal with the default normal sampler is identical to the
    default path, so it is not a separate branch here.
    """
    num_layers = len(layers) - 1
    in_feats = [int(f) for f in layers[:-1]]
    params = []
    for i, (l_in, l_out) in enumerate(zip(layers[:-1], layers[1:])):
        key, kw, kb = jax.random.split(key, 3)
        w = jax.random.normal(kw, (l_out, l_in), dtype=jnp.float32) * sigma_w
        b = jax.random.normal(kb, (l_out,), dtype=jnp.float32) * sigma_b
        if not scaling:
            w = w / math.sqrt(float(l_in))
        else:
            # Fold the forward-pass activation scaling into W:
            #   hidden layer l : x / sqrt(in_feats[l])
            #   last layer     : leaked loop var -> sqrt(in_feats[-2])
            # TODO(synk): num_layers == 1 with scaling=True is a NameError in
            # the PyTorch module; here we fall back to in_feats[0].
            idx = i if i < num_layers - 1 else max(num_layers - 2, 0)
            w = w / math.sqrt(float(in_feats[idx]))

        w_t = w.T                                        # (l_in, l_out)
        if i == num_layers - 1 and l_out % LANE != 0:
            d_pad = ((l_out + LANE - 1) // LANE) * LANE
            w_t = jnp.pad(w_t, ((0, 0), (0, d_pad - l_out)))          # zero cols
            b = jnp.pad(b, (0, d_pad - l_out), constant_values=NEG_BIG)

        params.append((jnp.asarray(w_t, dtype=jnp.bfloat16),
                       jnp.asarray(b.reshape(1, -1), dtype=jnp.float32)))
    return params


def perceptron_forward(x, params, d_out=None, classification=True,
                       batch_tile=1024, gridless_max_batch=128):
    """x: NCHW (or any shape with leading batch dim). Returns (B, d_out) f32."""
    x = x.reshape(x.shape[0], -1).astype(jnp.bfloat16)   # x.view(B, -1), one cast
    B, d_in = x.shape
    num_layers = len(params)
    d_pad = int(params[-1][0].shape[1])                  # lane-padded class dim
    if d_out is None:
        d_out = d_pad

    kernel = _make_fused_mlp_kernel(num_layers, classification)
    w_list = [w for (w, _) in params]
    b_list = [b for (_, b) in params]
    out_shape = jax.ShapeDtypeStruct((B, d_pad), jnp.float32)

    if B <= gridless_max_batch:
        # Tiny batch: single-block gridless call (no pipeline prologue).
        out = pl.pallas_call(kernel, out_shape=out_shape)(x, *w_list, *b_list)
        return out[:, :d_out] if d_out != d_pad else out

    # Gridded path: stream x/out tiles over a "parallel" batch axis
    # (megacore / dual-TC shardable); weights & biases stay VMEM-resident
    # (constant index_map).  Ensure at least 2 tiles so both v7x TCs get work.
    half = ((pl.cdiv(B, 2) + 7) // 8) * 8                # ceil(B/2), sublane mult
    tb = min(batch_tile, half)
    grid = (pl.cdiv(B, tb),)

    in_specs = [pl.BlockSpec((tb, d_in), lambda i: (i, 0))]
    in_specs += [pl.BlockSpec(w.shape, lambda i: (0, 0)) for w in w_list]
    in_specs += [pl.BlockSpec(b.shape, lambda i: (0, 0)) for b in b_list]
    out_specs = pl.BlockSpec((tb, d_pad), lambda i: (i, 0))

    out = pl.pallas_call(
        kernel,
        out_shape=out_shape,
        grid=grid,
        in_specs=in_specs,
        out_specs=out_specs,
        compiler_params=pltpu.CompilerParams(
            dimension_semantics=("parallel",)),
    )(x, *w_list, *b_list)
    return out[:, :d_out] if d_out != d_pad else out


# ---------------------------------- main --------------------------------------

if __name__ == "__main__":
    key = jax.random.PRNGKey(0)
    kx, kp, kx2 = jax.random.split(key, 3)

    # Small shapes consistent with the module: flatten NCHW -> MLP.
    B, C, H, W = 2, 4, 16, 16            # input x: (2, 4, 16, 16)
    layers = [C * H * W, 32, 32, 10]     # MLP widths, 10 classes

    x = jax.random.normal(kx, (B, C, H, W), dtype=jnp.float32)
    params = init_perceptron_params(kp, layers)

    out = jax.block_until_ready(
        perceptron_forward(x, params, d_out=layers[-1]))

    # sanity: shape, finiteness, log_softmax rows sum to 1 in prob space
    assert out.shape == (B, layers[-1])
    assert bool(jnp.all(jnp.isfinite(out)))
    assert bool(jnp.allclose(jnp.sum(jnp.exp(out), axis=1), 1.0, atol=1e-3))

    # Also exercise the gridded ("parallel" batch axis, >=2 tiles) path.
    B2 = 512
    x2 = jax.random.normal(kx2, (B2, C, H, W), dtype=jnp.float32)
    out2 = jax.block_until_ready(
        perceptron_forward(x2, params, d_out=layers[-1]))
    assert out2.shape == (B2, layers[-1])
    assert bool(jnp.all(jnp.isfinite(out2)))
    assert bool(jnp.allclose(jnp.sum(jnp.exp(out2), axis=1), 1.0, atol=1e-3))

    # scaling=True path (folded into weights) still runs through the same kernel.
    params_s = init_perceptron_params(kp, layers, scaling=True)
    out3 = jax.block_until_ready(
        perceptron_forward(x, params_s, d_out=layers[-1]))
    assert out3.shape == (B, layers[-1])
    assert bool(jnp.allclose(jnp.sum(jnp.exp(out3), axis=1), 1.0, atol=1e-3))

    print("KERNEL_OK")
</pallas_src>

<mosaic_0001>
module attributes {stable_mosaic.version = 11 : i64} {
  func.func @kernel(%arg0: memref<2x1024xbf16, #tpu.memory_space<vmem>>, %arg1: memref<1024x32xbf16, #tpu.memory_space<vmem>>, %arg2: memref<32x32xbf16, #tpu.memory_space<vmem>>, %arg3: memref<32x128xbf16, #tpu.memory_space<vmem>>, %arg4: memref<1x32xf32, #tpu.memory_space<vmem>>, %arg5: memref<1x32xf32, #tpu.memory_space<vmem>>, %arg6: memref<1x128xf32, #tpu.memory_space<vmem>>, %arg7: memref<2x128xf32, #tpu.memory_space<vmem>>) attributes {dimension_semantics = [], scalar_prefetch = 0 : i64, scratch_operands = 0 : i64, tpu.core_type = #tpu.core_type<tc>} {
    %c0 = arith.constant 0 : index
    %c0_0 = arith.constant 0 : index
    %0 = vector.load %arg0[%c0, %c0_0] : memref<2x1024xbf16, #tpu.memory_space<vmem>>, vector<2x1024xbf16>
    %c0_1 = arith.constant 0 : index
    %c0_2 = arith.constant 0 : index
    %1 = vector.load %arg1[%c0_1, %c0_2] : memref<1024x32xbf16, #tpu.memory_space<vmem>>, vector<1024x32xbf16>
    %cst = arith.constant dense<0.000000e+00> : vector<2x32xf32>
    %2 = tpu.matmul %0, %1, %cst {dimension_numbers = #tpu.dot_dimension_numbers<[1], [0], [0], [1], [0, 0, 1, 1], [], []>} : vector<2x1024xbf16>, vector<1024x32xbf16>, vector<2x32xf32> -> vector<2x32xf32>
    %c0_3 = arith.constant 0 : index
    %c0_4 = arith.constant 0 : index
    %3 = vector.load %arg4[%c0_3, %c0_4] : memref<1x32xf32, #tpu.memory_space<vmem>>, vector<1x32xf32>
    %4 = vector.broadcast %3 : vector<1x32xf32> to vector<2x32xf32>
    %5 = arith.addf %2, %4 : vector<2x32xf32>
    %6 = math.tanh %5 : vector<2x32xf32>
    %7 = arith.truncf %6 : vector<2x32xf32> to vector<2x32xbf16>
    %c0_5 = arith.constant 0 : index
    %c0_6 = arith.constant 0 : index
    %8 = vector.load %arg2[%c0_5, %c0_6] : memref<32x32xbf16, #tpu.memory_space<vmem>>, vector<32x32xbf16>
    %cst_7 = arith.constant dense<0.000000e+00> : vector<2x32xf32>
    %9 = tpu.matmul %7, %8, %cst_7 {dimension_numbers = #tpu.dot_dimension_numbers<[1], [0], [0], [1], [0, 0, 1, 1], [], []>} : vector<2x32xbf16>, vector<32x32xbf16>, vector<2x32xf32> -> vector<2x32xf32>
    %c0_8 = arith.constant 0 : index
    %c0_9 = arith.constant 0 : index
    %10 = vector.load %arg5[%c0_8, %c0_9] : memref<1x32xf32, #tpu.memory_space<vmem>>, vector<1x32xf32>
    %11 = vector.broadcast %10 : vector<1x32xf32> to vector<2x32xf32>
    %12 = arith.addf %9, %11 : vector<2x32xf32>
    %13 = math.tanh %12 : vector<2x32xf32>
    %14 = arith.truncf %13 : vector<2x32xf32> to vector<2x32xbf16>
    %c0_10 = arith.constant 0 : index
    %c0_11 = arith.constant 0 : index
    %15 = vector.load %arg3[%c0_10, %c0_11] : memref<32x128xbf16, #tpu.memory_space<vmem>>, vector<32x128xbf16>
    %cst_12 = arith.constant dense<0.000000e+00> : vector<2x128xf32>
    %16 = tpu.matmul %14, %15, %cst_12 {dimension_numbers = #tpu.dot_dimension_numbers<[1], [0], [0], [1], [0, 0, 1, 1], [], []>} : vector<2x32xbf16>, vector<32x128xbf16>, vector<2x128xf32> -> vector<2x128xf32>
    %c0_13 = arith.constant 0 : index
    %c0_14 = arith.constant 0 : index
    %17 = vector.load %arg6[%c0_13, %c0_14] : memref<1x128xf32, #tpu.memory_space<vmem>>, vector<1x128xf32>
    %18 = vector.broadcast %17 : vector<1x128xf32> to vector<2x128xf32>
    %19 = arith.addf %16, %18 : vector<2x128xf32>
    %cst_15 = arith.constant dense<0xFF800000> : vector<2xf32>
    %20 = vector.multi_reduction <maximumf>, %19, %cst_15 [1] : vector<2x128xf32> to vector<2xf32>
    %21 = vector.shape_cast %20 : vector<2xf32> to vector<2x1xf32>
    %22 = vector.broadcast %21 : vector<2x1xf32> to vector<2x128xf32>
    %23 = arith.subf %19, %22 : vector<2x128xf32>
    %24 = math.exp %23 : vector<2x128xf32>
    %cst_16 = arith.constant dense<0.000000e+00> : vector<2xf32>
    %25 = vector.multi_reduction <add>, %24, %cst_16 [1] : vector<2x128xf32> to vector<2xf32>
    %26 = vector.shape_cast %25 : vector<2xf32> to vector<2x1xf32>
    %27 = math.log %26 : vector<2x1xf32>
    %28 = arith.addf %21, %27 : vector<2x1xf32>
    %29 = vector.broadcast %28 : vector<2x1xf32> to vector<2x128xf32>
    %30 = arith.subf %19, %29 : vector<2x128xf32>
    %c0_17 = arith.constant 0 : index
    %c0_18 = arith.constant 0 : index
    %31 = vector.load %arg7[%c0_17, %c0_18] : memref<2x128xf32, #tpu.memory_space<vmem>>, vector<2x128xf32>
    tpu.vector_store %arg7[%c0_17, %c0_18], %30 {strides = array<i32>} : memref<2x128xf32, #tpu.memory_space<vmem>>, vector<2x128xf32>,
    return
  }
}

</mosaic_0001>

<llo_original>
// kernel: tpu_custom_call.1
$region0: #{tpu_custom_call.1}
  #allocation0 [shape = 'u32[]', space=smem, size = 0x4, offset = 0x4, fixed_abs, tag = 'smem constant byte address 0x4 - core index']
  #allocation1 [shape = 'u32[72,128]{1,0:T(1,128)}', space=vmem, size = 0x9000, scoped, tag = 'internal scratch']
  %s0 = inlined_call_operand.vmem [shape: bf16[2,1024], index: 0, kind: input, shape index: {}]
  %s1 = inlined_call_operand.vmem [shape: bf16[1024,32], index: 1, kind: input, shape index: {}]
  %s2 = inlined_call_operand.vmem [shape: bf16[32,32], index: 2, kind: input, shape index: {}]
  %s3 = inlined_call_operand.vmem [shape: bf16[32,128], index: 3, kind: input, shape index: {}]
  %s4 = inlined_call_operand.vmem [shape: f32[1,32], index: 4, kind: input, shape index: {}]
  %s5 = inlined_call_operand.vmem [shape: f32[1,32], index: 5, kind: input, shape index: {}]
  %s6 = inlined_call_operand.vmem [shape: f32[1,128], index: 6, kind: input, shape index: {}]
  %s7 = inlined_call_operand.hbm [shape: f32[2,128], index: 7, kind: output, shape index: {}]
  %s8 = sld [smem:[#allocation0]]
  $region38: #{tpu_custom_call.1} parent=0
    _
  %s10 = ssub.s32 1, %s8
  %s11 = scalar_select 0, %s10, %s8
  $region1: #{tpu_custom_call.1} parent=0
    #allocation2 [shape = 'u8[1024]{0}', space=vmem, size = 0x400, scoped, tag = 'output window, operand 0, single buffered']
    #allocation3 [shape = 's32[1]{0}', space=sflag, size = 0x4, scoped, tag = 'scoped memory for tpu_custom_call.1']
    %12 = vsyncpa [#allocation3], 0
    // Predicated region
    $region2: #{tpu_custom_call.1} parent=1 // pred_check
      _
    $region3: #{tpu_custom_call.1} parent=1 // pred_check_branch
      %14 = sbr.rel (0) target = $region5
    $region4: #{tpu_custom_call.1} parent=1 // pred_region
      _
    $region5: #{tpu_custom_call.1} parent=1 // pred_fallthru
      _
    // Predicated region
    $region6: #{tpu_custom_call.1} parent=1 // pred_check
      _
    $region7: #{tpu_custom_call.1} parent=1 // pred_check_branch
      %16 = sbr.rel (0) target = $region9
    $region8: #{tpu_custom_call.1} parent=1 // pred_region
      _
    $region9: #{tpu_custom_call.1} parent=1 // pred_fallthru
      _
    // Predicated region
    $region10: #{tpu_custom_call.1} parent=1 // pred_check
      _
    $region11: #{tpu_custom_call.1} parent=1 // pred_check_branch
      %18 = sbr.rel (0) target = $region13
    $region12: #{tpu_custom_call.1} parent=1 // pred_region
      _
    $region13: #{tpu_custom_call.1} parent=1 // pred_fallthru
      _
    // Predicated region
    $region14: #{tpu_custom_call.1} parent=1 // pred_check
      _
    $region15: #{tpu_custom_call.1} parent=1 // pred_check_branch
      %20 = sbr.rel (0) target = $region17
    $region16: #{tpu_custom_call.1} parent=1 // pred_region
      _
    $region17: #{tpu_custom_call.1} parent=1 // pred_fallthru
      _
    // Predicated region
    $region18: #{tpu_custom_call.1} parent=1 // pred_check
      _
    $region19: #{tpu_custom_call.1} parent=1 // pred_check_branch
      %22 = sbr.rel (0) target = $region21
    $region20: #{tpu_custom_call.1} parent=1 // pred_region
      _
    $region21: #{tpu_custom_call.1} parent=1 // pred_fallthru
      _
    // Predicated region
    $region22: #{tpu_custom_call.1} parent=1 // pred_check
      _
    $region23: #{tpu_custom_call.1} parent=1 // pred_check_branch
      %24 = sbr.rel (0) target = $region25
    $region24: #{tpu_custom_call.1} parent=1 // pred_region
      _
    $region25: #{tpu_custom_call.1} parent=1 // pred_fallthru
      _
    // Predicated region
    $region26: #{tpu_custom_call.1} parent=1 // pred_check
      _
    $region27: #{tpu_custom_call.1} parent=1 // pred_check_branch
      %26 = sbr.rel (0) target = $region29
    $region28: #{tpu_custom_call.1} parent=1 // pred_region
      _
    $region29: #{tpu_custom_call.1} parent=1 // pred_fallthru
      _
    %v28 = vld [vmem:[%s0] sm:$0xff]
    %v29 = vld [vmem:[%s1] sm:$0xf]
    %v30 = vld [vmem:[%s1 + $0x4] sm:$0xf]
    %v31 = vld [vmem:[%s1 + $0x8] sm:$0xf]
    %v32 = vld [vmem:[%s1 + $0xc] sm:$0xf]
    %v33 = vld [vmem:[%s1 + $0x10] sm:$0xf]
    %v34 = vld [vmem:[%s1 + $0x14] sm:$0xf]
    %v35 = vld [vmem:[%s1 + $0x18] sm:$0xf]
    %v36 = vld [vmem:[%s1 + $0x1c] sm:$0xf]
    %v37 = vld [vmem:[%s1 + $0x20] sm:$0xf]
    %v38 = vld [vmem:[%s1 + $0x24] sm:$0xf]
    %v39 = vld [vmem:[%s1 + $0x28] sm:$0xf]
    %v40 = vld [vmem:[%s1 + $0x2c] sm:$0xf]
    %v41 = vld [vmem:[%s1 + $0x30] sm:$0xf]
    %v42 = vld [vmem:[%s1 + $0x34] sm:$0xf]
    %v43 = vld [vmem:[%s1 + $0x38] sm:$0xf]
    %v44 = vld [vmem:[%s1 + $0x3c] sm:$0xf]
    %v45 = vld [vmem:[%s1 + $0x40] sm:$0xf]
    %v46 = vld [vmem:[%s1 + $0x44] sm:$0xf]
    %v47 = vld [vmem:[%s1 + $0x48] sm:$0xf]
    %v48 = vld [vmem:[%s1 + $0x4c] sm:$0xf]
    %v49 = vld [vmem:[%s1 + $0x50] sm:$0xf]
    %v50 = vld [vmem:[%s1 + $0x54] sm:$0xf]
    %v51 = vld [vmem:[%s1 + $0x58] sm:$0xf]
    %v52 = vld [vmem:[%s1 + $0x5c] sm:$0xf]
    %v53 = vld [vmem:[%s1 + $0x60] sm:$0xf]
    %v54 = vld [vmem:[%s1 + $0x64] sm:$0xf]
    %v55 = vld [vmem:[%s1 + $0x68] sm:$0xf]
    %v56 = vld [vmem:[%s1 + $0x6c] sm:$0xf]
    %v57 = vld [vmem:[%s1 + $0x70] sm:$0xf]
    %v58 = vld [vmem:[%s1 + $0x74] sm:$0xf]
    %v59 = vld [vmem:[%s1 + $0x78] sm:$0xf]
    %v60 = vld [vmem:[%s1 + $0x7c] sm:$0xf]
    %v61 = vld [vmem:[%s1 + $0x80] sm:$0xf]
    %v62 = vld [vmem:[%s1 + $0x84] sm:$0xf]
    %v63 = vld [vmem:[%s1 + $0x88] sm:$0xf]
    %v64 = vld [vmem:[%s1 + $0x8c] sm:$0xf]
    %v65 = vld [vmem:[%s1 + $0x90] sm:$0xf]
    %v66 = vld [vmem:[%s1 + $0x94] sm:$0xf]
    %v67 = vld [vmem:[%s1 + $0x98] sm:$0xf]
    %v68 = vld [vmem:[%s1 + $0x9c] sm:$0xf]
    %v69 = vld [vmem:[%s1 + $0xa0] sm:$0xf]
    %v70 = vld [vmem:[%s1 + $0xa4] sm:$0xf]
    %v71 = vld [vmem:[%s1 + $0xa8] sm:$0xf]
    %v72 = vld [vmem:[%s1 + $0xac] sm:$0xf]
    %v73 = vld [vmem:[%s1 + $0xb0] sm:$0xf]
    %v74 = vld [vmem:[%s1 + $0xb4] sm:$0xf]
    %v75 = vld [vmem:[%s1 + $0xb8] sm:$0xf]
    %v76 = vld [vmem:[%s1 + $0xbc] sm:$0xf]
    %v77 = vld [vmem:[%s1 + $0xc0] sm:$0xf]
    %v78 = vld [vmem:[%s1 + $0xc4] sm:$0xf]
    %v79 = vld [vmem:[%s1 + $0xc8] sm:$0xf]
    %v80 = vld [vmem:[%s1 + $0xcc] sm:$0xf]
    %v81 = vld [vmem:[%s1 + $0xd0] sm:$0xf]
    %v82 = vld [vmem:[%s1 + $0xd4] sm:$0xf]
    %v83 = vld [vmem:[%s1 + $0xd8] sm:$0xf]
    %v84 = vld [vmem:[%s1 + $0xdc] sm:$0xf]
    %v85 = vld [vmem:[%s1 + $0xe0] sm:$0xf]
    %v86 = vld [vmem:[%s1 + $0xe4] sm:$0xf]
    %v87 = vld [vmem:[%s1 + $0xe8] sm:$0xf]
    %v88 = vld [vmem:[%s1 + $0xec] sm:$0xf]
    %v89 = vld [vmem:[%s1 + $0xf0] sm:$0xf]
    %v90 = vld [vmem:[%s1 + $0xf4] sm:$0xf]
    %v91 = vld [vmem:[%s1 + $0xf8] sm:$0xf]
    %v92 = vld [vmem:[%s1 + $0xfc] sm:$0xf]
    %v93 = vld [vmem:[%s1 + $0x100] sm:$0xf]
    %v94 = vld [vmem:[%s1 + $0x104] sm:$0xf]
    %v95 = vld [vmem:[%s1 + $0x108] sm:$0xf]
    %v96 = vld [vmem:[%s1 + $0x10c] sm:$0xf]
    %v97 = vld [vmem:[%s1 + $0x110] sm:$0xf]
    %v98 = vld [vmem:[%s1 + $0x114] sm:$0xf]
    %v99 = vld [vmem:[%s1 + $0x118] sm:$0xf]
    %v100 = vld [vmem:[%s1 + $0x11c] sm:$0xf]
    %v101 = vld [vmem:[%s1 + $0x120] sm:$0xf]
    %v102 = vld [vmem:[%s1 + $0x124] sm:$0xf]
    %v103 = vld [vmem:[%s1 + $0x128] sm:$0xf]
    %v104 = vld [vmem:[%s1 + $0x12c] sm:$0xf]
    %v105 = vld [vmem:[%s1 + $0x130] sm:$0xf]
    %v106 = vld [vmem:[%s1 + $0x134] sm:$0xf]
    %v107 = vld [vmem:[%s1 + $0x138] sm:$0xf]
    %v108 = vld [vmem:[%s1 + $0x13c] sm:$0xf]
    %v109 = vld [vmem:[%s1 + $0x140] sm:$0xf]
    %v110 = vld [vmem:[%s1 + $0x144] sm:$0xf]
    %v111 = vld [vmem:[%s1 + $0x148] sm:$0xf]
    %v112 = vld [vmem:[%s1 + $0x14c] sm:$0xf]
    %v113 = vld [vmem:[%s1 + $0x150] sm:$0xf]
    %v114 = vld [vmem:[%s1 + $0x154] sm:$0xf]
    %v115 = vld [vmem:[%s1 + $0x158] sm:$0xf]
    %v116 = vld [vmem:[%s1 + $0x15c] sm:$0xf]
    %v117 = vld [vmem:[%s1 + $0x160] sm:$0xf]
    %v118 = vld [vmem:[%s1 + $0x164] sm:$0xf]
    %v119 = vld [vmem:[%s1 + $0x168] sm:$0xf]
    %v120 = vld [vmem:[%s1 + $0x16c] sm:$0xf]
    %v121 = vld [vmem:[%s1 + $0x170] sm:$0xf]
    %v122 = vld [vmem:[%s1 + $0x174] sm:$0xf]
    %v123 = vld [vmem:[%s1 + $0x178] sm:$0xf]
    %v124 = vld [vmem:[%s1 + $0x17c] sm:$0xf]
    %v125 = vld [vmem:[%s1 + $0x180] sm:$0xf]
    %v126 = vld [vmem:[%s1 + $0x184] sm:$0xf]
    %v127 = vld [vmem:[%s1 + $0x188] sm:$0xf]
    %v128 = vld [vmem:[%s1 + $0x18c] sm:$0xf]
    %v129 = vld [vmem:[%s1 + $0x190] sm:$0xf]
    %v130 = vld [vmem:[%s1 + $0x194] sm:$0xf]
    %v131 = vld [vmem:[%s1 + $0x198] sm:$0xf]
    %v132 = vld [vmem:[%s1 + $0x19c] sm:$0xf]
    %v133 = vld [vmem:[%s1 + $0x1a0] sm:$0xf]
    %v134 = vld [vmem:[%s1 + $0x1a4] sm:$0xf]
    %v135 = vld [vmem:[%s1 + $0x1a8] sm:$0xf]
    %v136 = vld [vmem:[%s1 + $0x1ac] sm:$0xf]
    %v137 = vld [vmem:[%s1 + $0x1b0] sm:$0xf]
    %v138 = vld [vmem:[%s1 + $0x1b4] sm:$0xf]
    %v139 = vld [vmem:[%s1 + $0x1b8] sm:$0xf]
    %v140 = vld [vmem:[%s1 + $0x1bc] sm:$0xf]
    %v141 = vld [vmem:[%s1 + $0x1c0] sm:$0xf]
    %v142 = vld [vmem:[%s1 + $0x1c4] sm:$0xf]
    %v143 = vld [vmem:[%s1 + $0x1c8] sm:$0xf]
    %v144 = vld [vmem:[%s1 + $0x1cc] sm:$0xf]
    %v145 = vld [vmem:[%s1 + $0x1d0] sm:$0xf]
    %v146 = vld [vmem:[%s1 + $0x1d4] sm:$0xf]
    %v147 = vld [vmem:[%s1 + $0x1d8] sm:$0xf]
    %v148 = vld [vmem:[%s1 + $0x1dc] sm:$0xf]
    %v149 = vld [vmem:[%s1 + $0x1e0] sm:$0xf]
    %v150 = vld [vmem:[%s1 + $0x1e4] sm:$0xf]
    %v151 = vld [vmem:[%s1 + $0x1e8] sm:$0xf]
    %v152 = vld [vmem:[%s1 + $0x1ec] sm:$0xf]
    %v153 = vld [vmem:[%s1 + $0x1f0] sm:$0xf]
    %v154 = vld [vmem:[%s1 + $0x1f4] sm:$0xf]
    %v155 = vld [vmem:[%s1 + $0x1f8] sm:$0xf]
    %v156 = vld [vmem:[%s1 + $0x1fc] sm:$0xf]
    %v157 = vld [vmem:[%s4] sm:$0x1]
    %v159 = vperm.slane %v157, 0
    %162 = vst [vmem:[#allocation1] ss:$9 sm:$0xff] %v28
    %v163 = vld [vmem:[#allocation1] sm:$0xff]
    %v164 = vld [vmem:[#allocation1 + $0x9] sm:$0xff]
    %v165 = vld [vmem:[#allocation1 + $0x12] sm:$0xff]
    %v166 = vld [vmem:[#allocation1 + $0x1b] sm:$0xff]
    %v167 = vld [vmem:[#allocation1 + $0x24] sm:$0xff]
    %v168 = vld [vmem:[#allocation1 + $0x2d] sm:$0xff]
    %v169 = vld [vmem:[#allocation1 + $0x36] sm:$0xff]
    %v170 = vld [vmem:[#allocation1 + $0x3f] sm:$0xff]
    %v307 = vunpack.c.l.b16 %v29
    %v308 = vunpack.c.l.b16 %v30
    %v309 = vunpack.c.l.b16 %v31
    %v310 = vunpack.c.l.b16 %v32
    %v311 = vunpack.c.l.b16 %v33
    %v312 = vunpack.c.l.b16 %v34
    %v313 = vunpack.c.l.b16 %v35
    %v314 = vunpack.c.l.b16 %v36
    %v315 = vunpack.c.l.b16 %v37
    %v316 = vunpack.c.l.b16 %v38
    %v317 = vunpack.c.l.b16 %v39
    %v318 = vunpack.c.l.b16 %v40
    %v319 = vunpack.c.l.b16 %v41
    %v320 = vunpack.c.l.b16 %v42
    %v321 = vunpack.c.l.b16 %v43
    %v322 = vunpack.c.l.b16 %v44
    %v323 = vunpack.c.l.b16 %v45
    %v324 = vunpack.c.l.b16 %v46
    %v325 = vunpack.c.l.b16 %v47
    %v326 = vunpack.c.l.b16 %v48
    %v327 = vunpack.c.l.b16 %v49
    %v328 = vunpack.c.l.b16 %v50
    %v329 = vunpack.c.l.b16 %v51
    %v330 = vunpack.c.l.b16 %v52
    %v331 = vunpack.c.l.b16 %v53
    %v332 = vunpack.c.l.b16 %v54
    %v333 = vunpack.c.l.b16 %v55
    %v334 = vunpack.c.l.b16 %v56
    %v335 = vunpack.c.l.b16 %v57
    %v336 = vunpack.c.l.b16 %v58
    %v337 = vunpack.c.l.b16 %v59
    %v338 = vunpack.c.l.b16 %v60
    %v339 = vunpack.c.l.b16 %v61
    %v340 = vunpack.c.l.b16 %v62
    %v341 = vunpack.c.l.b16 %v63
    %v342 = vunpack.c.l.b16 %v64
    %v343 = vunpack.c.l.b16 %v65
    %v344 = vunpack.c.l.b16 %v66
    %v345 = vunpack.c.l.b16 %v67
    %v346 = vunpack.c.l.b16 %v68
    %v347 = vunpack.c.l.b16 %v69
    %v348 = vunpack.c.l.b16 %v70
    %v349 = vunpack.c.l.b16 %v71
    %v350 = vunpack.c.l.b16 %v72
    %v351 = vunpack.c.l.b16 %v73
    %v352 = vunpack.c.l.b16 %v74
    %v353 = vunpack.c.l.b16 %v75
    %v354 = vunpack.c.l.b16 %v76
    %v355 = vunpack.c.l.b16 %v77
    %v356 = vunpack.c.l.b16 %v78
    %v357 = vunpack.c.l.b16 %v79
    %v358 = vunpack.c.l.b16 %v80
    %v359 = vunpack.c.l.b16 %v81
    %v360 = vunpack.c.l.b16 %v82
    %v361 = vunpack.c.l.b16 %v83
    %v362 = vunpack.c.l.b16 %v84
    %v363 = vunpack.c.l.b16 %v85
    %v364 = vunpack.c.l.b16 %v86
    %v365 = vunpack.c.l.b16 %v87
    %v366 = vunpack.c.l.b16 %v88
    %v367 = vunpack.c.l.b16 %v89
    %v368 = vunpack.c.l.b16 %v90
    %v369 = vunpack.c.l.b16 %v91
    %v370 = vunpack.c.l.b16 %v92
    %v371 = vunpack.c.l.b16 %v93
    %v372 = vunpack.c.l.b16 %v94
    %v373 = vunpack.c.l.b16 %v95
    %v374 = vunpack.c.l.b16 %v96
    %v375 = vunpack.c.l.b16 %v97
    %v376 = vunpack.c.l.b16 %v98
    %v377 = vunpack.c.l.b16 %v99
    %v378 = vunpack.c.l.b16 %v100
    %v379 = vunpack.c.l.b16 %v101
    %v380 = vunpack.c.l.b16 %v102
    %v381 = vunpack.c.l.b16 %v103
    %v382 = vunpack.c.l.b16 %v104
    %v383 = vunpack.c.l.b16 %v105
    %v384 = vunpack.c.l.b16 %v106
    %v385 = vunpack.c.l.b16 %v107
    %v386 = vunpack.c.l.b16 %v108
    %v387 = vunpack.c.l.b16 %v109
    %v388 = vunpack.c.l.b16 %v110
    %v389 = vunpack.c.l.b16 %v111
    %v390 = vunpack.c.l.b16 %v112
    %v391 = vunpack.c.l.b16 %v113
    %v392 = vunpack.c.l.b16 %v114
    %v393 = vunpack.c.l.b16 %v115
    %v394 = vunpack.c.l.b16 %v116
    %v395 = vunpack.c.l.b16 %v117
    %v396 = vunpack.c.l.b16 %v118
    %v397 = vunpack.c.l.b16 %v119
    %v398 = vunpack.c.l.b16 %v120
    %v399 = vunpack.c.l.b16 %v121
    %v400 = vunpack.c.l.b16 %v122
    %v401 = vunpack.c.l.b16 %v123
    %v402 = vunpack.c.l.b16 %v124
    %v403 = vunpack.c.l.b16 %v125
    %v404 = vunpack.c.l.b16 %v126
    %v405 = vunpack.c.l.b16 %v127
    %v406 = vunpack.c.l.b16 %v128
    %v407 = vunpack.c.l.b16 %v129
    %v408 = vunpack.c.l.b16 %v130
    %v409 = vunpack.c.l.b16 %v131
    %v410 = vunpack.c.l.b16 %v132
    %v411 = vunpack.c.l.b16 %v133
    %v412 = vunpack.c.l.b16 %v134
    %v413 = vunpack.c.l.b16 %v135
    %v414 = vunpack.c.l.b16 %v136
    %v415 = vunpack.c.l.b16 %v137
    %v416 = vunpack.c.l.b16 %v138
    %v417 = vunpack.c.l.b16 %v139
    %v418 = vunpack.c.l.b16 %v140
    %v419 = vunpack.c.l.b16 %v141
    %v420 = vunpack.c.l.b16 %v142
    %v421 = vunpack.c.l.b16 %v143
    %v422 = vunpack.c.l.b16 %v144
    %v423 = vunpack.c.l.b16 %v145
    %v424 = vunpack.c.l.b16 %v146
    %v425 = vunpack.c.l.b16 %v147
    %v426 = vunpack.c.l.b16 %v148
    %v427 = vunpack.c.l.b16 %v149
    %v428 = vunpack.c.l.b16 %v150
    %v429 = vunpack.c.l.b16 %v151
    %v430 = vunpack.c.l.b16 %v152
    %v431 = vunpack.c.l.b16 %v153
    %v432 = vunpack.c.l.b16 %v154
    %v433 = vunpack.c.l.b16 %v155
    %v434 = vunpack.c.l.b16 %v156
    %v435 = vpack.c.b16 %v308, %v307
    %v436 = vpack.c.b16 %v310, %v309
    %v437 = vpack.c.b16 %v312, %v311
    %v438 = vpack.c.b16 %v314, %v313
    %v439 = vpack.c.b16 %v316, %v315
    %v440 = vpack.c.b16 %v318, %v317
    %v441 = vpack.c.b16 %v320, %v319
    %v442 = vpack.c.b16 %v322, %v321
    %v443 = vpack.c.b16 %v324, %v323
    %v444 = vpack.c.b16 %v326, %v325
    %v445 = vpack.c.b16 %v328, %v327
    %v446 = vpack.c.b16 %v330, %v329
    %v447 = vpack.c.b16 %v332, %v331
    %v448 = vpack.c.b16 %v334, %v333
    %v449 = vpack.c.b16 %v336, %v335
    %v450 = vpack.c.b16 %v338, %v337
    %v451 = vpack.c.b16 %v340, %v339
    %v452 = vpack.c.b16 %v342, %v341
    %v453 = vpack.c.b16 %v344, %v343
    %v454 = vpack.c.b16 %v346, %v345
    %v455 = vpack.c.b16 %v348, %v347
    %v456 = vpack.c.b16 %v350, %v349
    %v457 = vpack.c.b16 %v352, %v351
    %v458 = vpack.c.b16 %v354, %v353
    %v459 = vpack.c.b16 %v356, %v355
    %v460 = vpack.c.b16 %v358, %v357
    %v461 = vpack.c.b16 %v360, %v359
    %v462 = vpack.c.b16 %v362, %v361
    %v463 = vpack.c.b16 %v364, %v363
    %v464 = vpack.c.b16 %v366, %v365
    %v465 = vpack.c.b16 %v368, %v367
    %v466 = vpack.c.b16 %v370, %v369
    %v467 = vpack.c.b16 %v372, %v371
    %v468 = vpack.c.b16 %v374, %v373
    %v469 = vpack.c.b16 %v376, %v375
    %v470 = vpack.c.b16 %v378, %v377
    %v471 = vpack.c.b16 %v380, %v379
    %v472 = vpack.c.b16 %v382, %v381
    %v473 = vpack.c.b16 %v384, %v383
    %v474 = vpack.c.b16 %v386, %v385
    %v475 = vpack.c.b16 %v388, %v387
    %v476 = vpack.c.b16 %v390, %v389
    %v477 = vpack.c.b16 %v392, %v391
    %v478 = vpack.c.b16 %v394, %v393
    %v479 = vpack.c.b16 %v396, %v395
    %v480 = vpack.c.b16 %v398, %v397
    %v481 = vpack.c.b16 %v400, %v399
    %v482 = vpack.c.b16 %v402, %v401
    %v483 = vpack.c.b16 %v404, %v403
    %v484 = vpack.c.b16 %v406, %v405
    %v485 = vpack.c.b16 %v408, %v407
    %v486 = vpack.c.b16 %v410, %v409
    %v487 = vpack.c.b16 %v412, %v411
    %v488 = vpack.c.b16 %v414, %v413
    %v489 = vpack.c.b16 %v416, %v415
    %v490 = vpack.c.b16 %v418, %v417
    %v491 = vpack.c.b16 %v420, %v419
    %v492 = vpack.c.b16 %v422, %v421
    %v493 = vpack.c.b16 %v424, %v423
    %v494 = vpack.c.b16 %v426, %v425
    %v495 = vpack.c.b16 %v428, %v427
    %v496 = vpack.c.b16 %v430, %v429
    %v497 = vpack.c.b16 %v432, %v431
    %v498 = vpack.c.b16 %v434, %v433
    %563 = vmatpush.bf16.msra.mxu0 %v442
    %564 = vmatpush.bf16.msra.mxu0 %v441
    %565 = vmatpush.bf16.msra.mxu0 %v440
    %566 = vmatpush.bf16.msra.mxu0 %v439
    %567 = vmatpush.bf16.msra.mxu0 %v438
    %568 = vmatpush.bf16.msra.mxu0 %v437
    %569 = vmatpush.bf16.msra.mxu0 %v436
    %570 = vmatpush.bf16.msra.mxu0 %v435
    %571 = vmatmul.bf16.gmra.mxu0 %v163
    %v572 = vpop.f32.mrf.mxu0
    %v573 = vadd.f32 %v159, %v572
    %v574 = vpop.f32.mrf.mxu0
    %575 = vdwg.mxu0
    %576 = vmatpush.bf16.msra.mxu0 %v450
    %577 = vmatpush.bf16.msra.mxu0 %v449
    %578 = vmatpush.bf16.msra.mxu0 %v448
    %579 = vmatpush.bf16.msra.mxu0 %v447
    %580 = vmatpush.bf16.msra.mxu0 %v446
    %581 = vmatpush.bf16.msra.mxu0 %v445
    %582 = vmatpush.bf16.msra.mxu0 %v444
    %583 = vmatpush.bf16.msra.mxu0 %v443
    %584 = vmatmul.bf16.gmra.mxu0 %v164
    %v585 = vpop.f32.mrf.mxu0
    %v586 = vadd.f32 %v573, %v585
    %v587 = vpop.f32.mrf.mxu0
    %588 = vdwg.mxu0
    %589 = vmatpush.bf16.msra.mxu0 %v458
    %590 = vmatpush.bf16.msra.mxu0 %v457
    %591 = vmatpush.bf16.msra.mxu0 %v456
    %592 = vmatpush.bf16.msra.mxu0 %v455
    %593 = vmatpush.bf16.msra.mxu0 %v454
    %594 = vmatpush.bf16.msra.mxu0 %v453
    %595 = vmatpush.bf16.msra.mxu0 %v452
    %596 = vmatpush.bf16.msra.mxu0 %v451
    %597 = vmatmul.bf16.gmra.mxu0 %v165
    %v598 = vpop.f32.mrf.mxu0
    %v599 = vadd.f32 %v586, %v598
    %v600 = vpop.f32.mrf.mxu0
    %601 = vdwg.mxu0
    %602 = vmatpush.bf16.msra.mxu0 %v466
    %603 = vmatpush.bf16.msra.mxu0 %v465
    %604 = vmatpush.bf16.msra.mxu0 %v464
    %605 = vmatpush.bf16.msra.mxu0 %v463
    %606 = vmatpush.bf16.msra.mxu0 %v462
    %607 = vmatpush.bf16.msra.mxu0 %v461
    %608 = vmatpush.bf16.msra.mxu0 %v460
    %609 = vmatpush.bf16.msra.mxu0 %v459
    %610 = vmatmul.bf16.gmra.mxu0 %v166
    %v611 = vpop.f32.mrf.mxu0
    %v612 = vadd.f32 %v599, %v611
    %v613 = vpop.f32.mrf.mxu0
    %614 = vdwg.mxu0
    %615 = vmatpush.bf16.msra.mxu0 %v474
    %616 = vmatpush.bf16.msra.mxu0 %v473
    %617 = vmatpush.bf16.msra.mxu0 %v472
    %618 = vmatpush.bf16.msra.mxu0 %v471
    %619 = vmatpush.bf16.msra.mxu0 %v470
    %620 = vmatpush.bf16.msra.mxu0 %v469
    %621 = vmatpush.bf16.msra.mxu0 %v468
    %622 = vmatpush.bf16.msra.mxu0 %v467
    %623 = vmatmul.bf16.gmra.mxu0 %v167
    %v624 = vpop.f32.mrf.mxu0
    %v625 = vadd.f32 %v612, %v624
    %v626 = vpop.f32.mrf.mxu0
    %627 = vdwg.mxu0
    %628 = vmatpush.bf16.msra.mxu0 %v482
    %629 = vmatpush.bf16.msra.mxu0 %v481
    %630 = vmatpush.bf16.msra.mxu0 %v480
    %631 = vmatpush.bf16.msra.mxu0 %v479
    %632 = vmatpush.bf16.msra.mxu0 %v478
    %633 = vmatpush.bf16.msra.mxu0 %v477
    %634 = vmatpush.bf16.msra.mxu0 %v476
    %635 = vmatpush.bf16.msra.mxu0 %v475
    %636 = vmatmul.bf16.gmra.mxu0 %v168
    %v637 = vpop.f32.mrf.mxu0
    %v638 = vadd.f32 %v625, %v637
    %v639 = vpop.f32.mrf.mxu0
    %640 = vdwg.mxu0
    %641 = vmatpush.bf16.msra.mxu0 %v490
    %642 = vmatpush.bf16.msra.mxu0 %v489
    %643 = vmatpush.bf16.msra.mxu0 %v488
    %644 = vmatpush.bf16.msra.mxu0 %v487
    %645 = vmatpush.bf16.msra.mxu0 %v486
    %646 = vmatpush.bf16.msra.mxu0 %v485
    %647 = vmatpush.bf16.msra.mxu0 %v484
    %648 = vmatpush.bf16.msra.mxu0 %v483
    %649 = vmatmul.bf16.gmra.mxu0 %v169
    %v650 = vpop.f32.mrf.mxu0
    %v651 = vadd.f32 %v638, %v650
    %v652 = vpop.f32.mrf.mxu0
    %653 = vdwg.mxu0
    %654 = vmatpush.bf16.msra.mxu0 %v498
    %655 = vmatpush.bf16.msra.mxu0 %v497
    %656 = vmatpush.bf16.msra.mxu0 %v496
    %657 = vmatpush.bf16.msra.mxu0 %v495
    %658 = vmatpush.bf16.msra.mxu0 %v494
    %659 = vmatpush.bf16.msra.mxu0 %v493
    %660 = vmatpush.bf16.msra.mxu0 %v492
    %661 = vmatpush.bf16.msra.mxu0 %v491
    %662 = vmatmul.bf16.gmra.mxu0 %v170
    %v663 = vpop.f32.mrf.mxu0
    %v664 = vadd.f32 %v651, %v663
    %v665 = vpop.f32.mrf.mxu0
    %666 = vdwg.mxu0
    %v667 = vtanh.pop %v664
    %v668 = vpack.c.bf16 %v667, %v667
    %v669 = vld [vmem:[%s2] sm:$0xf]
    %v670 = vld [vmem:[%s2 + $0x4] sm:$0xf]
    %v671 = vld [vmem:[%s2 + $0x8] sm:$0xf]
    %v672 = vld [vmem:[%s2 + $0xc] sm:$0xf]
    %v673 = vld [vmem:[%s5] sm:$0x1]
    %v675 = vperm.slane %v673, 0
    %v681 = vunpack.c.l.b16 %v669
    %v682 = vunpack.c.l.b16 %v670
    %v683 = vunpack.c.l.b16 %v671
    %v684 = vunpack.c.l.b16 %v672
    %v685 = vpack.c.b16 %v682, %v681
    %v686 = vpack.c.b16 %v684, %v683
    %vm689 = vcmask 261120
    %v691 = vsel %vm689, %v668, 0
    %693 = vmatpush.bf16.msra.mxu0 0
    %694 = vmatpush.bf16.msra.mxu0 0
    %695 = vmatpush.bf16.msra.mxu0 0
    %696 = vmatpush.bf16.msra.mxu0 0
    %697 = vmatpush.bf16.msra.mxu0 0
    %698 = vmatpush.bf16.msra.mxu0 0
    %699 = vmatpush.bf16.msra.mxu0 %v686
    %700 = vmatpush.bf16.msra.mxu0 %v685
    %701 = vmatmul.bf16.gmra.mxu0 %v691
    %v702 = vpop.f32.mrf.mxu0
    %v703 = vadd.f32 %v675, %v702
    %v704 = vpop.f32.mrf.mxu0
    %705 = vdwg.mxu0
    %v706 = vtanh.pop %v703
    %v707 = vpack.c.bf16 %v706, %v706
    %v708 = vld [vmem:[%s3] sm:$0xf]
    %v709 = vld [vmem:[%s3 + $0x4] sm:$0xf]
    %v710 = vld [vmem:[%s3 + $0x8] sm:$0xf]
    %v711 = vld [vmem:[%s3 + $0xc] sm:$0xf]
    %v712 = vld [vmem:[%s6] sm:$0x1]
    %v714 = vperm.slane %v712, 0
    %v720 = vunpack.c.l.b16 %v708
    %v721 = vunpack.c.l.b16 %v709
    %v722 = vunpack.c.l.b16 %v710
    %v723 = vunpack.c.l.b16 %v711
    %v724 = vpack.c.b16 %v721, %v720
    %v725 = vpack.c.b16 %v723, %v722
    %v729 = vsel %vm689, %v707, 0
    %731 = vmatpush.bf16.msra.mxu0 0
    %732 = vmatpush.bf16.msra.mxu0 0
    %733 = vmatpush.bf16.msra.mxu0 0
    %734 = vmatpush.bf16.msra.mxu0 0
    %735 = vmatpush.bf16.msra.mxu0 0
    %736 = vmatpush.bf16.msra.mxu0 0
    %737 = vmatpush.bf16.msra.mxu0 %v725
    %738 = vmatpush.bf16.msra.mxu0 %v724
    %739 = vmatmul.bf16.gmra.mxu0 %v729
    %v740 = vpop.f32.mrf.mxu0
    %v741 = vadd.f32 %v714, %v740
    %v742 = vpop.f32.mrf.mxu0
    %743 = vdwg.mxu0
    %vm744 = vcmask 1041408
    %v745 = vsel %vm744, %v741, -inf
    %746 = vmax.xlane.f32.xlu0 %v745
    %v747 = vpop.xlane.xlu0 %746
    %v748 = vsub.f32 %v741, %v747
    %v749 = vmul.f32 %v748, 1.442695
    %v750 = vpow.pop %v749
    %v751 = vsel %vm744, %v750, 0.0
    %752 = vadd.xlane.f32.xlu0 %v751
    %v753 = vpop.xlane.xlu0 %752
    %v754 = vlog2.pop %v753
    %v755 = vmul.f32 %v754, 0.6931472
    %v756 = vadd.f32 %v747, %v755
    %v757 = vsub.f32 %v741, %v756
    %758 = vst [vmem:[#allocation2] sm:$0x3] %v757
    // Predicated region
    $region30: #{tpu_custom_call.1} parent=1 // pred_check
      _
    $region31: #{tpu_custom_call.1} parent=1 // pred_check_branch
      %760 = sbr.rel (0) target = $region33
    $region32: #{tpu_custom_call.1} parent=1 // pred_region
      %762 = vsyncadd [#allocation3], 0
      %s764 = sshll.u32 [#allocation2], 4
      %s765 = int_to_ptr.vmem [resolvable:$true] %s764
      %s766 = sshll.u32 %s7, 4
      %s767 = int_to_ptr.hbm [resolvable:$true] %s766
      %769 = dma.vmem_to_hbm [thread:$0]  %s765, 32, %s767, [#allocation3]
    $region33: #{tpu_custom_call.1} parent=1 // pred_fallthru
      _
    // Predicated region
    $region34: #{tpu_custom_call.1} parent=1 // pred_check
      _
    $region35: #{tpu_custom_call.1} parent=1 // pred_check_branch
      %771 = sbr.rel (0) target = $region37
    $region36: #{tpu_custom_call.1} parent=1 // pred_region
      %773 = dma.done [#allocation3], 32
    $region37: #{tpu_custom_call.1} parent=1 // pred_fallthru
      _
    %774 = vsyncpa [#allocation3], 1

</llo_original>
